<compile_context>
chip_gen: v6e
topology: v6e:2x2x1
jax: 0.10.0
libtpu: 0.0.40
codegen_flags: <defaults>
</compile_context>

<pallas_src>
import jax
import jax.numpy as jnp
from jax.experimental import pallas as pl
from jax.experimental.pallas import tpu as pltpu

C = 32  # FCGF feature dim == config['arch']['vote_out_dim'] (extra_feature_header=False)


def _vote_head_kernel(x_ref, w1_ref, b1_ref, w2_ref, b2_ref, score_ref, feat_ref):
    x = x_ref[...].astype(jnp.float32)                                     # [C, TN]

    # Conv1d(C, C, 1) with BatchNorm1d (eval) folded in:  h = W1f @ x + b1f
    h = jnp.dot(w1_ref[...], x, preferred_element_type=jnp.float32) + b1_ref[...]
    h = jnp.maximum(h, 0.0)                                                # ReLU

    # Conv1d(C, 1, 1) as a sublane multiply-reduce (VPU/XLU, avoids 2nd MXU push)
    logit = jnp.sum(w2_ref[...] * h, axis=0, keepdims=True) + b2_ref[...]  # [1, TN]
    score_ref[...] = jax.nn.sigmoid(logit)                                 # lane-dense row

    # F.normalize(p=2, dim=channel): x * rsqrt(max(sum(x^2), eps^2))
    sumsq = jnp.sum(x * x, axis=0, keepdims=True)                          # [1, TN]
    feat_ref[...] = x * jax.lax.rsqrt(jnp.maximum(sumsq, 1e-24))           # [C, TN]


def _pad_and_tile(n):
    """Pad point count to a lane multiple and split into (at most) 2 big blocks.

    2 blocks -> minimal per-step overhead + DMA/compute overlap on v5e/v6e, and
    an even split across v7x's two TensorCores.  5000 -> pad 5120, tn = 2560.
    """
    n128 = -(-n // 128) * 128
    if n128 <= 128:
        return n128, n128                       # tiny input: single block
    nblk = 2
    tn = -(-n128 // (nblk * 128)) * 128         # ceil(n128/nblk) rounded up to 128
    return nblk * tn, tn


def vote_head_pallas(x_cn, w1f, b1f, w2_col, b2):
    """x_cn: [C, N] features.  Returns (scores [1, N], normalized feats [C, N])."""
    c, n = x_cn.shape
    n_pad, tn = _pad_and_tile(n)
    if n_pad != n:
        x_cn = jnp.pad(x_cn, ((0, 0), (0, n_pad - n)))   # fuses with producer under jit
    grid = (n_pad // tn,)

    scores, feats = pl.pallas_call(
        _vote_head_kernel,
        out_shape=(jax.ShapeDtypeStruct((1, n_pad), jnp.float32),
                   jax.ShapeDtypeStruct((c, n_pad), jnp.float32)),
        grid_spec=pltpu.PrefetchScalarGridSpec(
            num_scalar_prefetch=0,
            grid=grid,
            in_specs=[
                pl.BlockSpec((c, tn), lambda i: (0, i)),   # features tile    [C, TN]
                pl.BlockSpec((c, c), lambda i: (0, 0)),    # W1 (BN-folded)   [C, C]
                pl.BlockSpec((c, 1), lambda i: (0, 0)),    # b1 (BN-folded)   [C, 1]
                pl.BlockSpec((c, 1), lambda i: (0, 0)),    # W2 column        [C, 1]
                pl.BlockSpec((1, 1), lambda i: (0, 0)),    # b2               [1, 1]
            ],
            out_specs=[
                pl.BlockSpec((1, tn), lambda i: (0, i)),   # scores (lane-dense row)
                pl.BlockSpec((c, tn), lambda i: (0, i)),   # normalized features
            ],
        ),
        compiler_params=pltpu.CompilerParams(dimension_semantics=("parallel",)),
    )(x_cn, w1f, b1f, w2_col, b2)

    return scores[:, :n], feats[:, :n]


class VoteFusionModuleFCGFOnlyPallas:
    """JAX/Pallas re-implementation of the forward pass (score_type='header',
    balance_weight=0, multi_fuse_layer=False, extra_feature_header=False,
    score_nms_radius=0, eval mode)."""

    def __init__(self, key, c=C):
        self.c = c
        k = jax.random.split(key, 8)
        bound1 = 1.0 / jnp.sqrt(c)
        # Conv1d(C, C, 1): weight [C_out, C_in], bias [C]
        self.w1 = jax.random.uniform(k[0], (c, c), jnp.float32, -bound1, bound1)
        self.b1 = jax.random.uniform(k[1], (c,), jnp.float32, -bound1, bound1)
        # BatchNorm1d(C) eval-mode parameters
        self.gamma = 1.0 + 0.1 * jax.random.normal(k[2], (c,), jnp.float32)
        self.beta = 0.1 * jax.random.normal(k[3], (c,), jnp.float32)
        self.running_mean = 0.05 * jax.random.normal(k[4], (c,), jnp.float32)
        self.running_var = jnp.abs(1.0 + 0.1 * jax.random.normal(k[5], (c,), jnp.float32))
        self.bn_eps = 1e-5
        # Conv1d(C, 1, 1)
        self.w2 = jax.random.uniform(k[6], (1, c), jnp.float32, -bound1, bound1)
        self.b2 = jax.random.uniform(k[7], (1,), jnp.float32, -bound1, bound1)
        # Single jitted forward: gather / transpose / pad / kernel / slice / feats.T
        # all fuse into one XLA dispatch.
        self._fwd = jax.jit(self._forward)

    def _folded_params(self):
        # BN(eval) after Conv1d:  y = (W1 x + b1 - mean) * scale + beta
        #                           = (scale*W1) x + (scale*b1 + beta - scale*mean)
        scale = self.gamma / jnp.sqrt(self.running_var + self.bn_eps)
        w1f = self.w1 * scale[:, None]                                   # [C_out, C_in]
        b1f = self.b1 * scale + self.beta - self.running_mean * scale    # [C]
        return (w1f,
                b1f.reshape(self.c, 1),
                self.w2.reshape(self.c, 1),    # W2 as a column for the sublane reduce
                self.b2.reshape(1, 1))

    def _forward(self, pcd_seed_xyz, pcd_features, perm_key):
        # --- glue (plain JAX, fused under jit): mirrors the torch forward plumbing ---
        # TODO(synk): self.pcd_conv(pcd_xyz) (FCGF sparse conv) replaced by given features.
        n_full = pcd_seed_xyz.shape[1]
        num_pcd = min(n_full, 5000)
        rand_idx = jax.random.permutation(perm_key, n_full)[:num_pcd]

        x_nc = pcd_features[rand_idx]                    # [num_pcd, C]  contiguous row gather
        xyz = pcd_seed_xyz[0][rand_idx]                  # [num_pcd, 3]
        x_cn = x_nc.T                                    # [C, num_pcd]  lane-dense kernel layout

        # --- Pallas kernel: score header + feature L2-normalisation ---
        scores, feats = vote_head_pallas(x_cn, *self._folded_params())

        return {
            'vote_xyz': xyz,                 # [num_pcd, 3]
            'vote_scores': scores[0],        # [num_pcd]
            'vote_features': feats.T,        # [num_pcd, C]  (transpose stays inside the jit)
        }

    def __call__(self, inputs, perm_key):
        return self._fwd(inputs['pcd_xyz'], inputs['pcd_features'], perm_key)

    # pure-JAX reference of the same math (for verification)
    def reference(self, inputs, perm_key):
        pcd_seed_xyz = inputs['pcd_xyz']
        x_full = inputs['pcd_features']
        n_full = pcd_seed_xyz.shape[1]
        rand_idx = jax.random.permutation(perm_key, n_full)[:min(n_full, 5000)]
        x = x_full[rand_idx]
        xyz = pcd_seed_xyz[0][rand_idx]
        scale = self.gamma / jnp.sqrt(self.running_var + self.bn_eps)
        shift = self.beta - self.running_mean * scale
        h = x @ self.w1.T + self.b1
        h = jnp.maximum(h * scale + shift, 0.0)
        s = jax.nn.sigmoid(h @ self.w2.T + self.b2)[:, 0]
        f = x / jnp.maximum(jnp.sqrt(jnp.sum(x * x, -1, keepdims=True)), 1e-12)
        return {'vote_xyz': xyz, 'vote_scores': s, 'vote_features': f}


if __name__ == "__main__":
    key = jax.random.PRNGKey(0)
    k_param, k_xyz, k_feat, k_rgbx, k_rgbf, k_perm = jax.random.split(key, 6)

    N = 300          # intentionally NOT a multiple of 128 (exercises the padding path)
    N_RGB = 64
    inputs = {
        'pcd_xyz': jax.random.uniform(k_xyz, (1, N, 3), jnp.float32),
        'pcd_features': jax.random.normal(k_feat, (N, C), jnp.float32),   # FCGF features
        # rgb_* are carried by the original forward but never used for the outputs:
        'rgb_xyz': jax.random.uniform(k_rgbx, (1, N_RGB, 3), jnp.float32),
        'rgb_features': jax.random.normal(k_rgbf, (1, 128, N_RGB), jnp.float32),
    }

    module = VoteFusionModuleFCGFOnlyPallas(k_param)

    out = module(inputs, k_perm)
    out = jax.block_until_ready(out)

    ref = module.reference(inputs, k_perm)
    assert jnp.allclose(out['vote_scores'], ref['vote_scores'], atol=1e-5, rtol=1e-5)
    assert jnp.allclose(out['vote_features'], ref['vote_features'], atol=1e-5, rtol=1e-5)
    assert jnp.allclose(out['vote_xyz'], ref['vote_xyz'])
    assert out['vote_xyz'].shape == (N, 3)
    assert out['vote_scores'].shape == (N,)
    assert out['vote_features'].shape == (N, C)

    print("KERNEL_OK")
</pallas_src>

<mosaic_0001>
module attributes {stable_mosaic.version = 11 : i64} {
  func.func @_vote_head_kernel(%arg0: i32, %arg1: memref<32x256xf32, #tpu.memory_space<vmem>>, %arg2: memref<32x32xf32, #tpu.memory_space<vmem>>, %arg3: memref<32x1xf32, #tpu.memory_space<vmem>>, %arg4: memref<32x1xf32, #tpu.memory_space<vmem>>, %arg5: memref<1x1xf32, #tpu.memory_space<vmem>>, %arg6: memref<1x256xf32, #tpu.memory_space<vmem>>, %arg7: memref<32x256xf32, #tpu.memory_space<vmem>>) attributes {dimension_semantics = [#tpu.dimension_semantics<parallel>], iteration_bounds = array<i64: 2>, scalar_prefetch = 0 : i64, scratch_operands = 0 : i64, tpu.core_type = #tpu.core_type<tc>, window_params = [{transform_indices = @transform_0, window_bounds = array<i64: 32, 256>}, {pipeline_mode = #tpu.pipeline_mode<synchronous>, transform_indices = @transform_1, window_bounds = array<i64: 32, 32>}, {pipeline_mode = #tpu.pipeline_mode<synchronous>, transform_indices = @transform_2, window_bounds = array<i64: 32, 1>}, {pipeline_mode = #tpu.pipeline_mode<synchronous>, transform_indices = @transform_3, window_bounds = array<i64: 32, 1>}, {pipeline_mode = #tpu.pipeline_mode<synchronous>, transform_indices = @transform_4, window_bounds = array<i64: 1, 1>}, {transform_indices = @transform_5, window_bounds = array<i64: 1, 256>}, {transform_indices = @transform_6, window_bounds = array<i64: 32, 256>}]} {
    %c0 = arith.constant 0 : index
    %c0_0 = arith.constant 0 : index
    %0 = vector.load %arg1[%c0, %c0_0] : memref<32x256xf32, #tpu.memory_space<vmem>>, vector<32x256xf32>
    %c0_1 = arith.constant 0 : index
    %c0_2 = arith.constant 0 : index
    %1 = vector.load %arg2[%c0_1, %c0_2] : memref<32x32xf32, #tpu.memory_space<vmem>>, vector<32x32xf32>
    %cst = arith.constant dense<0.000000e+00> : vector<32x256xf32>
    %2 = tpu.matmul %1, %0, %cst {dimension_numbers = #tpu.dot_dimension_numbers<[1], [0], [0], [1], [0, 0, 1, 1], [], []>} : vector<32x32xf32>, vector<32x256xf32>, vector<32x256xf32> -> vector<32x256xf32>
    %c0_3 = arith.constant 0 : index
    %c0_4 = arith.constant 0 : index
    %3 = vector.load %arg3[%c0_3, %c0_4] : memref<32x1xf32, #tpu.memory_space<vmem>>, vector<32x1xf32>
    %4 = vector.broadcast %3 : vector<32x1xf32> to vector<32x256xf32>
    %5 = arith.addf %2, %4 : vector<32x256xf32>
    %cst_5 = arith.constant 0.000000e+00 : f32
    %6 = vector.broadcast %cst_5 : f32 to vector<32x256xf32>
    %7 = arith.maximumf %5, %6 : vector<32x256xf32>
    %c0_6 = arith.constant 0 : index
    %c0_7 = arith.constant 0 : index
    %8 = vector.load %arg4[%c0_6, %c0_7] : memref<32x1xf32, #tpu.memory_space<vmem>>, vector<32x1xf32>
    %9 = vector.broadcast %8 : vector<32x1xf32> to vector<32x256xf32>
    %10 = arith.mulf %9, %7 : vector<32x256xf32>
    %cst_8 = arith.constant dense<0.000000e+00> : vector<256xf32>
    %11 = vector.multi_reduction <add>, %10, %cst_8 [0] : vector<32x256xf32> to vector<256xf32>
    %12 = vector.shape_cast %11 : vector<256xf32> to vector<1x256xf32>
    %c0_9 = arith.constant 0 : index
    %c0_10 = arith.constant 0 : index
    %13 = vector.load %arg5[%c0_9, %c0_10] : memref<1x1xf32, #tpu.memory_space<vmem>>, vector<1x1xf32>
    %14 = vector.broadcast %13 : vector<1x1xf32> to vector<1x256xf32>
    %15 = arith.addf %12, %14 : vector<1x256xf32>
    %16 = arith.negf %15 : vector<1x256xf32>
    %17 = math.exp %16 : vector<1x256xf32>
    %cst_11 = arith.constant 1.000000e+00 : f32
    %18 = vector.broadcast %cst_11 : f32 to vector<1x256xf32>
    %19 = arith.addf %18, %17 : vector<1x256xf32>
    %20 = arith.divf %18, %19 : vector<1x256xf32>
    %c0_12 = arith.constant 0 : index
    %c0_13 = arith.constant 0 : index
    %21 = vector.load %arg6[%c0_12, %c0_13] : memref<1x256xf32, #tpu.memory_space<vmem>>, vector<1x256xf32>
    tpu.vector_store %arg6[%c0_12, %c0_13], %20 {strides = array<i32>} : memref<1x256xf32, #tpu.memory_space<vmem>>, vector<1x256xf32>,
    %22 = arith.mulf %0, %0 : vector<32x256xf32>
    %cst_14 = arith.constant dense<0.000000e+00> : vector<256xf32>
    %23 = vector.multi_reduction <add>, %22, %cst_14 [0] : vector<32x256xf32> to vector<256xf32>
    %24 = vector.shape_cast %23 : vector<256xf32> to vector<1x256xf32>
    %cst_15 = arith.constant 1.000000e-24 : f32
    %25 = vector.broadcast %cst_15 : f32 to vector<1x256xf32>
    %26 = arith.maximumf %24, %25 : vector<1x256xf32>
    %27 = math.rsqrt %26 : vector<1x256xf32>
    %28 = vector.broadcast %27 : vector<1x256xf32> to vector<32x256xf32>
    %29 = arith.mulf %0, %28 : vector<32x256xf32>
    %c0_16 = arith.constant 0 : index
    %c0_17 = arith.constant 0 : index
    %30 = vector.load %arg7[%c0_16, %c0_17] : memref<32x256xf32, #tpu.memory_space<vmem>>, vector<32x256xf32>
    tpu.vector_store %arg7[%c0_16, %c0_17], %29 {strides = array<i32>} : memref<32x256xf32, #tpu.memory_space<vmem>>, vector<32x256xf32>,
    return
  }
  func.func @transform_0(%arg0: i32) -> (i32, i32) {
    %c0_i32 = arith.constant 0 : i32
    %c0_i32_0 = arith.constant 0 : i32
    return %c0_i32, %arg0 : i32, i32
  }
  func.func @transform_1(%arg0: i32) -> (i32, i32) {
    %c0_i32 = arith.constant 0 : i32
    %c0_i32_0 = arith.constant 0 : i32
    %c0_i32_1 = arith.constant 0 : i32
    return %c0_i32, %c0_i32_0 : i32, i32
  }
  func.func @transform_2(%arg0: i32) -> (i32, i32) {
    %c0_i32 = arith.constant 0 : i32
    %c0_i32_0 = arith.constant 0 : i32
    %c0_i32_1 = arith.constant 0 : i32
    return %c0_i32, %c0_i32_0 : i32, i32
  }
  func.func @transform_3(%arg0: i32) -> (i32, i32) {
    %c0_i32 = arith.constant 0 : i32
    %c0_i32_0 = arith.constant 0 : i32
    %c0_i32_1 = arith.constant 0 : i32
    return %c0_i32, %c0_i32_0 : i32, i32
  }
  func.func @transform_4(%arg0: i32) -> (i32, i32) {
    %c0_i32 = arith.constant 0 : i32
    %c0_i32_0 = arith.constant 0 : i32
    %c0_i32_1 = arith.constant 0 : i32
    return %c0_i32, %c0_i32_0 : i32, i32
  }
  func.func @transform_5(%arg0: i32) -> (i32, i32) {
    %c0_i32 = arith.constant 0 : i32
    %c0_i32_0 = arith.constant 0 : i32
    return %c0_i32, %arg0 : i32, i32
  }
  func.func @transform_6(%arg0: i32) -> (i32, i32) {
    %c0_i32 = arith.constant 0 : i32
    %c0_i32_0 = arith.constant 0 : i32
    return %c0_i32, %arg0 : i32, i32
  }
}

</mosaic_0001>

<llo_original>
// kernel: _forward.1
$region0: #{_forward.1}
  #allocation0 [shape = 'u32[]', space=smem, size = 0x4, offset = 0x4, fixed_abs, tag = 'smem constant byte address 0x4 - core index']
  #allocation1 [shape = 'u32[144,128]{1,0:T(1,128)}', space=vmem, size = 0x12000, scoped, tag = 'internal scratch']
  #allocation2 [shape = 'f32[1,1]{1,0:T(1,128)S(1)}', space=vmem, size = 0x200, scoped, tag = 'scoped memory for _forward.1']
  %s0 = inlined_call_operand.vmem [shape: f32[32,512], index: 0, kind: input, shape index: {}]
  %s1 = inlined_call_operand.vmem [shape: f32[32,32], index: 1, kind: input, shape index: {}]
  %s2 = inlined_call_operand.vmem [shape: f32[32,1], index: 2, kind: input, shape index: {}]
  %s3 = inlined_call_operand.vmem [shape: f32[32,1], index: 3, kind: input, shape index: {}]
  %s4 = inlined_call_operand.<no memory space> [shape: f32[1,1], index: 4, kind: input, shape index: {}]
  %s5 = inlined_call_operand.vmem [shape: f32[1,512], index: 5, kind: output, shape index: {0}]
  %s6 = inlined_call_operand.vmem [shape: f32[32,512], index: 6, kind: output, shape index: {1}]
  %7 = xla_tuple %s5, %s6
  %s8 = sld [smem:[#allocation0]]
  $region103: #{_forward.1} parent=0
    _
  %s10 = ssub.s32 1, %s8
  %s11 = scalar_select 0, %s10, %s8
  %v12 = vstv %s4
  %13 = vst [vmem:[#allocation2] sm:$0x1] %v12
  $region1: #{_forward.1} parent=0
    #allocation3 [shape = 'u8[65536]{0}', space=vmem, size = 0x10000, scoped, tag = 'input window, operand 0']
    #allocation4 [shape = 'u8[65536]{0}', space=vmem, size = 0x10000, scoped, tag = 'output window, operand 1']
    loop: start=0, step=1, limit=4
    $region2: #{_forward.1} parent=1 // loop_pre_header
      _
    $region3: #{_forward.1} parent=1 // loop_header
      %s15 = sphi 0, %s19
      %p16 = scmp.ge.s32.totalorder %s15, 4
      %s25 = sphi 0, %s27
      %s28 = sphi 0, %s25
      %s29 = sphi 0, %s28
      %s45 = sphi 0, %s29
      %s49 = sphi 0, %s49
      %s51 = sphi 0, %s49
      %s52 = sphi 0, %s51
      %s66 = sphi 0, %s52
      %s70 = sphi 0, %s70
      %s72 = sphi 0, %s70
      %s73 = sphi 0, %s72
      %s87 = sphi 0, %s73
      %s91 = sphi 0, %s91
      %s93 = sphi 0, %s91
      %s94 = sphi 0, %s93
      %s108 = sphi 0, %s94
      %s112 = sphi 0, %s112
      %s114 = sphi 0, %s112
      %s115 = sphi 0, %s114
      %s129 = sphi 0, %s115
      %s135 = sphi 0, %s137
      %s138 = sphi 0, %s135
      %s139 = sphi 0, %s138
      %s155 = sphi 0, %s139
      %s161 = sphi 0, %s163
      %s164 = sphi 0, %s161
      %s165 = sphi 0, %s164
      %s181 = sphi 0, %s165
    $region4: #{_forward.1} parent=1 // loop_header_branch
      %18 = sbr.rel (%p16) target = $region8
    $region5: #{_forward.1} parent=1 // loop_body
      %s20 = ssub.s32 %s15, 1
      %s21 = ssub.s32 %s15, 2
      %s22 = sadd.s32 %s15, 1
      %s23 = ssub.s32 %s15, %s22
      %p24 = scmp.eq.s32.totalorder %s23, 0
      %s26 = sadd.s32 %s25, 1
      %s27 = scalar_select %p24, %s25, %s26
      %p30 = pneg %p24
      %p31 = scmp.eq.s32.totalorder %s15, 1
      %p32 = por %p30, %p31
      %p33 = scmp.ne.s32.totalorder %s25, %s28
      %p34 = scmp.eq.s32.totalorder %s15, 0
      %p35 = por %p33, %p34
      %p36 = scmp.ne.s32.totalorder %s25, %s28
      %p37 = scmp.eq.s32.totalorder %s20, 1
      %p38 = por %p36, %p37
      %p39 = scmp.ne.s32.totalorder %s28, %s29
      %p40 = scmp.eq.s32.totalorder %s20, 0
      %p41 = por %p39, %p40
      %p42 = scmp.ne.s32.totalorder %s28, %s29
      %p43 = scmp.eq.s32.totalorder %s21, 1
      %p44 = por %p42, %p43
      %p46 = scmp.ne.s32.totalorder %s29, %s45
      %p47 = scmp.eq.s32.totalorder %s21, 0
      %p48 = por %p46, %p47
      %s50 = sadd.s32 %s49, 1
      %p53 = scmp.eq.s32.totalorder %s15, 1
      %p54 = scmp.ne.s32.totalorder %s49, %s51
      %p55 = scmp.eq.s32.totalorder %s15, 0
      %p56 = por %p54, %p55
      %p57 = scmp.ne.s32.totalorder %s49, %s51
      %p58 = scmp.eq.s32.totalorder %s20, 1
      %p59 = por %p57, %p58
      %p60 = scmp.ne.s32.totalorder %s51, %s52
      %p61 = scmp.eq.s32.totalorder %s20, 0
      %p62 = por %p60, %p61
      %p63 = scmp.ne.s32.totalorder %s51, %s52
      %p64 = scmp.eq.s32.totalorder %s21, 1
      %p65 = por %p63, %p64
      %p67 = scmp.ne.s32.totalorder %s52, %s66
      %p68 = scmp.eq.s32.totalorder %s21, 0
      %p69 = por %p67, %p68
      %s71 = sadd.s32 %s70, 1
      %p74 = scmp.eq.s32.totalorder %s15, 1
      %p75 = scmp.ne.s32.totalorder %s70, %s72
      %p76 = scmp.eq.s32.totalorder %s15, 0
      %p77 = por %p75, %p76
      %p78 = scmp.ne.s32.totalorder %s70, %s72
      %p79 = scmp.eq.s32.totalorder %s20, 1
      %p80 = por %p78, %p79
      %p81 = scmp.ne.s32.totalorder %s72, %s73
      %p82 = scmp.eq.s32.totalorder %s20, 0
      %p83 = por %p81, %p82
      %p84 = scmp.ne.s32.totalorder %s72, %s73
      %p85 = scmp.eq.s32.totalorder %s21, 1
      %p86 = por %p84, %p85
      %p88 = scmp.ne.s32.totalorder %s73, %s87
      %p89 = scmp.eq.s32.totalorder %s21, 0
      %p90 = por %p88, %p89
      %s92 = sadd.s32 %s91, 1
      %p95 = scmp.eq.s32.totalorder %s15, 1
      %p96 = scmp.ne.s32.totalorder %s91, %s93
      %p97 = scmp.eq.s32.totalorder %s15, 0
      %p98 = por %p96, %p97
      %p99 = scmp.ne.s32.totalorder %s91, %s93
      %p100 = scmp.eq.s32.totalorder %s20, 1
      %p101 = por %p99, %p100
      %p102 = scmp.ne.s32.totalorder %s93, %s94
      %p103 = scmp.eq.s32.totalorder %s20, 0
      %p104 = por %p102, %p103
      %p105 = scmp.ne.s32.totalorder %s93, %s94
      %p106 = scmp.eq.s32.totalorder %s21, 1
      %p107 = por %p105, %p106
      %p109 = scmp.ne.s32.totalorder %s94, %s108
      %p110 = scmp.eq.s32.totalorder %s21, 0
      %p111 = por %p109, %p110
      %s113 = sadd.s32 %s112, 1
      %p116 = scmp.eq.s32.totalorder %s15, 1
      %p117 = scmp.ne.s32.totalorder %s112, %s114
      %p118 = scmp.eq.s32.totalorder %s15, 0
      %p119 = por %p117, %p118
      %p120 = scmp.ne.s32.totalorder %s112, %s114
      %p121 = scmp.eq.s32.totalorder %s20, 1
      %p122 = por %p120, %p121
      %p123 = scmp.ne.s32.totalorder %s114, %s115
      %p124 = scmp.eq.s32.totalorder %s20, 0
      %p125 = por %p123, %p124
      %p126 = scmp.ne.s32.totalorder %s114, %s115
      %p127 = scmp.eq.s32.totalorder %s21, 1
      %p128 = por %p126, %p127
      %p130 = scmp.ne.s32.totalorder %s115, %s129
      %p131 = scmp.eq.s32.totalorder %s21, 0
      %p132 = por %p130, %p131
      %s133 = ssub.s32 %s15, %s22
      %p134 = scmp.eq.s32.totalorder %s133, 0
      %s136 = sadd.s32 %s135, 1
      %s137 = scalar_select %p134, %s135, %s136
      %p140 = pneg %p134
      %p141 = scmp.eq.s32.totalorder %s15, 1
      %p142 = por %p140, %p141
      %p143 = scmp.ne.s32.totalorder %s135, %s138
      %p144 = scmp.eq.s32.totalorder %s15, 0
      %p145 = por %p143, %p144
      %p146 = scmp.ne.s32.totalorder %s135, %s138
      %p147 = scmp.eq.s32.totalorder %s20, 1
      %p148 = por %p146, %p147
      %p149 = scmp.ne.s32.totalorder %s138, %s139
      %p150 = scmp.eq.s32.totalorder %s20, 0
      %p151 = por %p149, %p150
      %p152 = scmp.ne.s32.totalorder %s138, %s139
      %p153 = scmp.eq.s32.totalorder %s21, 1
      %p154 = por %p152, %p153
      %p156 = scmp.ne.s32.totalorder %s139, %s155
      %p157 = scmp.eq.s32.totalorder %s21, 0
      %p158 = por %p156, %p157
      %s159 = ssub.s32 %s15, %s22
      %p160 = scmp.eq.s32.totalorder %s159, 0
      %s162 = sadd.s32 %s161, 1
      %s163 = scalar_select %p160, %s161, %s162
      %p166 = pneg %p160
      %p167 = scmp.eq.s32.totalorder %s15, 1
      %p168 = por %p166, %p167
      %p169 = scmp.ne.s32.totalorder %s161, %s164
      %p170 = scmp.eq.s32.totalorder %s15, 0
      %p171 = por %p169, %p170
      %p172 = scmp.ne.s32.totalorder %s161, %s164
      %p173 = scmp.eq.s32.totalorder %s20, 1
      %p174 = por %p172, %p173
      %p175 = scmp.ne.s32.totalorder %s164, %s165
      %p176 = scmp.eq.s32.totalorder %s20, 0
      %p177 = por %p175, %p176
      %p178 = scmp.ne.s32.totalorder %s164, %s165
      %p179 = scmp.eq.s32.totalorder %s21, 1
      %p180 = por %p178, %p179
      %p182 = scmp.ne.s32.totalorder %s165, %s181
      %p183 = scmp.eq.s32.totalorder %s21, 0
      %p184 = por %p182, %p183
      %p185 = scmp.le.s32.totalorder 1, %s15
      %p186 = scmp.lt.s32.totalorder %s15, 3
      %p187 = pnand %p185, %p186
      %p188 = pneg %p187
      // Predicated region
      $region9: #{_forward.1} parent=5 // pred_check
        _
      $region10: #{_forward.1} parent=5 // pred_check_branch
        %190 = sbr.rel (%p187) target = $region12
      $region11: #{_forward.1} parent=5 // pred_region
        %s191 = ssub.s32 %s15, 1
        // Predicated region
        $region13: #{_forward.1} parent=11 // pred_check
          %p192 = pneg %p62
        $region14: #{_forward.1} parent=11 // pred_check_branch
          %194 = sbr.rel (%p192) target = $region16
        $region15: #{_forward.1} parent=11 // pred_region
          _
        $region16: #{_forward.1} parent=11 // pred_fallthru
          _
        // Predicated region
        $region17: #{_forward.1} parent=11 // pred_check
          %p195 = pneg %p83
        $region18: #{_forward.1} parent=11 // pred_check_branch
          %197 = sbr.rel (%p195) target = $region20
        $region19: #{_forward.1} parent=11 // pred_region
          _
        $region20: #{_forward.1} parent=11 // pred_fallthru
          _
        // Predicated region
        $region21: #{_forward.1} parent=11 // pred_check
          %p198 = pneg %p104
        $region22: #{_forward.1} parent=11 // pred_check_branch
          %200 = sbr.rel (%p198) target = $region24
        $region23: #{_forward.1} parent=11 // pred_region
          _
        $region24: #{_forward.1} parent=11 // pred_fallthru
          _
        // Predicated region
        $region25: #{_forward.1} parent=11 // pred_check
          %p201 = pneg %p125
        $region26: #{_forward.1} parent=11 // pred_check_branch
          %203 = sbr.rel (%p201) target = $region28
        $region27: #{_forward.1} parent=11 // pred_region
          _
        $region28: #{_forward.1} parent=11 // pred_fallthru
          _
      $region12: #{_forward.1} parent=5 // pred_fallthru
        _
      %p204 = scmp.lt.s32.totalorder %s15, 2
      // Predicated region
      $region29: #{_forward.1} parent=5 // pred_check
        %p205 = pneg %p204
      $region30: #{_forward.1} parent=5 // pred_check_branch
        %207 = sbr.rel (%p205) target = $region32
      $region31: #{_forward.1} parent=5 // pred_region
        // Predicated region
        $region33: #{_forward.1} parent=31 // pred_check
          %p208 = pneg %p35
        $region34: #{_forward.1} parent=31 // pred_check_branch
          %210 = sbr.rel (%p208) target = $region36
        $region35: #{_forward.1} parent=31 // pred_region
          %s211 = sand.u32 %s25, 1
          %s212 = sand.u32 %s25, 1
          %s213 = smul.addr %s212, 64
          %s214 = scalar_lea.vmem [#allocation3], %s213
          %s215 = smul.u32 2, %s15
          %s216 = smul.addr %s215, 8
          %s217 = scalar_lea.vmem %s0, %s216
          // Predicated region
          $region37: #{_forward.1} parent=35 // pred_check
            _
          $region38: #{_forward.1} parent=35 // pred_check_branch
            %219 = sbr.rel (0) target = $region40
          $region39: #{_forward.1} parent=35 // pred_region
            // Predicated region
            $region41: #{_forward.1} parent=39 // pred_check
              _
            $region42: #{_forward.1} parent=39 // pred_check_branch
              %221 = sbr.rel (0) target = $region44
            $region43: #{_forward.1} parent=39 // pred_region
              loop: start=0, step=1, limit=1
              $region45: #{_forward.1} parent=43 // loop_pre_header
                _
              $region46: #{_forward.1} parent=43 // loop_header
                %s223 = sphi 0, %s227
                %p224 = scmp.ge.s32.totalorder %s223, 1
                %s228 = sphi %s217, %s217
                %s229 = sphi %s214, %s214
              $region47: #{_forward.1} parent=43 // loop_header_branch
                %226 = sbr.rel (%p224) target = $region51
              $region48: #{_forward.1} parent=43 // loop_body
                %v230 = vld [vmem:[%s228] sm:$0xff]
                %231 = vst [vmem:[%s229] sm:$0xff] %v230
                %v232 = vld [vmem:[%s228 + $0x8] sm:$0xff]
                %233 = vst [vmem:[%s229 + $0x8] sm:$0xff] %v232
                %v234 = vld [vmem:[%s228 + $0x20] sm:$0xff]
                %235 = vst [vmem:[%s229 + $0x10] sm:$0xff] %v234
                %v236 = vld [vmem:[%s228 + $0x28] sm:$0xff]
                %237 = vst [vmem:[%s229 + $0x18] sm:$0xff] %v236
                %v238 = vld [vmem:[%s228 + $0x40] sm:$0xff]
                %239 = vst [vmem:[%s229 + $0x20] sm:$0xff] %v238
                %v240 = vld [vmem:[%s228 + $0x48] sm:$0xff]
                %241 = vst [vmem:[%s229 + $0x28] sm:$0xff] %v240
                %v242 = vld [vmem:[%s228 + $0x60] sm:$0xff]
                %243 = vst [vmem:[%s229 + $0x30] sm:$0xff] %v242
                %v244 = vld [vmem:[%s228 + $0x68] sm:$0xff]
                %245 = vst [vmem:[%s229 + $0x38] sm:$0xff] %v244
              $region49: #{_forward.1} parent=43 // loop_footer
                %s227 = sadd.s32 1, %s223
              $region50: #{_forward.1} parent=43 // loop_footer_branch
                %222 = sbr.rel target = $region46
              $region51: #{_forward.1} parent=43 // loop_exit
                _
            $region44: #{_forward.1} parent=39 // pred_fallthru
              _
            // Predicated region
            $region52: #{_forward.1} parent=39 // pred_check
              _
            $region53: #{_forward.1} parent=39 // pred_check_branch
              %247 = sbr.rel target = $region55
            $region54: #{_forward.1} parent=39 // pred_region
              _
            $region55: #{_forward.1} parent=39 // pred_fallthru
              _
          $region40: #{_forward.1} parent=35 // pred_fallthru
            _
          %248 = vnop
        $region36: #{_forward.1} parent=31 // pred_fallthru
          _
      $region32: #{_forward.1} parent=5 // pred_fallthru
        _
      %p249 = scmp.le.s32.totalorder 1, %s15
      %p250 = scmp.lt.s32.totalorder %s15, 3
      %p251 = pnand %p249, %p250
      %p252 = pneg %p251
      // Predicated region
      $region56: #{_forward.1} parent=5 // pred_check
        _
      $region57: #{_forward.1} parent=5 // pred_check_branch
        %254 = sbr.rel (%p251) target = $region59
      $region58: #{_forward.1} parent=5 // pred_region
        %s255 = ssub.s32 %s15, 1
        %s256 = sand.u32 %s28, 1
        %s257 = sand.u32 %s28, 1
        %s258 = smul.addr %s257, 64
        %s259 = scalar_lea.vmem [#allocation3], %s258
        // Predicated region
        $region60: #{_forward.1} parent=58 // pred_check
          %p260 = pneg %p41
        $region61: #{_forward.1} parent=58 // pred_check_branch
          %262 = sbr.rel (%p260) target = $region63
        $region62: #{_forward.1} parent=58 // pred_region
          _
        $region63: #{_forward.1} parent=58 // pred_fallthru
          _
        %s263 = sand.u32 %s28, 1
        %s264 = sand.u32 %s28, 1
        %s265 = smul.addr %s264, 64
        %s266 = scalar_lea.vmem [#allocation3], %s265
        %p267 = pneg %p41
        %p268 = pneg %p38
        %p269 = pneg %p62
        %p270 = pneg %p59
        %p271 = pneg %p83
        %p272 = pneg %p80
        %p273 = pneg %p104
        %p274 = pneg %p101
        %p275 = pneg %p125
        %p276 = pneg %p122
        %p277 = pneg %p151
        %p278 = pneg %p148
        %s279 = smul.u32 2, %s20
        %p280 = scmp.lt.s32.totalorder %s279, 3
        %s281 = scalar_select %p280, %s279, 3
        %s282 = scalar_lea.vmem %s5, %s281
        %p283 = pneg %p177
        %p284 = pneg %p174
        %s285 = sand.u32 %s164, 1
        %s286 = sand.u32 %s164, 1
        %s287 = smul.addr %s286, 64
        %s288 = scalar_lea.vmem [#allocation4], %s287
        %s289 = smul.u32 2, %s20
        %s290 = smul.u32 2, %s20
        %p291 = scmp.lt.s32.totalorder %s290, 3
        %s292 = scalar_select %p291, %s290, 3
        %s293 = scalar_lea.vmem %s5, %s292
        %s294 = smul.u32 2, %s20
        %s295 = smul.u32 2, %s20
        %v296 = vld [vmem:[%s259] sm:$0xff]
        %v297 = vld [vmem:[%s259 + $0x8] sm:$0xff]
        %v298 = vld [vmem:[%s259 + $0x10] sm:$0xff]
        %v299 = vld [vmem:[%s259 + $0x18] sm:$0xff]
        %v300 = vld [vmem:[%s259 + $0x20] sm:$0xff]
        %v301 = vld [vmem:[%s259 + $0x28] sm:$0xff]
        %v302 = vld [vmem:[%s259 + $0x30] sm:$0xff]
        %v303 = vld [vmem:[%s259 + $0x38] sm:$0xff]
        %v304 = vld [vmem:[%s1] sm:$0xff]
        %v305 = vld [vmem:[%s1 + $0x8] sm:$0xff]
        %v306 = vld [vmem:[%s1 + $0x10] sm:$0xff]
        %v307 = vld [vmem:[%s1 + $0x18] sm:$0xff]
        %v308 = vld [vmem:[%s2] sm:$0xff]
        %v309 = vld [vmem:[%s2 + $0x8] sm:$0xff]
        %v310 = vld [vmem:[%s2 + $0x10] sm:$0xff]
        %v311 = vld [vmem:[%s2 + $0x18] sm:$0xff]
        %313 = vset.pattern.permute.xlu0 0
        %314 = vperm.xlu0 %313, %v308
        %v315 = vpop.permute.xlu0 %314
        %318 = vset.pattern.permute.xlu0 0
        %319 = vperm.xlu0 %318, %v309
        %v320 = vpop.permute.xlu0 %319
        %323 = vset.pattern.permute.xlu0 0
        %324 = vperm.xlu0 %323, %v310
        %v325 = vpop.permute.xlu0 %324
        %328 = vset.pattern.permute.xlu0 0
        %329 = vperm.xlu0 %328, %v311
        %v330 = vpop.permute.xlu0 %329
        %vm332 = vcmask 261120
        %v334 = vsel %vm332, %v304, 0
        %v337 = vsel %vm332, %v305, 0
        %v340 = vsel %vm332, %v306, 0
        %v343 = vsel %vm332, %v307, 0
        %345 = vmatprep.subr.mxu0 0.0
        %346 = vmatpush1.msra.mxu0 0.0
        %347 = vmatprep.subr.mxu0 0.0
        %348 = vmatpush1.msra.mxu0 0.0
        %349 = vmatprep.subr.mxu0 0.0
        %350 = vmatpush1.msra.mxu0 0.0
        %351 = vmatprep.subr.mxu0 0.0
        %352 = vmatpush1.msra.mxu0 0.0
        %353 = vmatprep.subr.mxu0 0.0
        %354 = vmatpush1.msra.mxu0 0.0
        %355 = vmatprep.subr.mxu0 0.0
        %356 = vmatpush1.msra.mxu0 0.0
        %357 = vmatprep.subr.mxu0 0.0
        %358 = vmatpush1.msra.mxu0 0.0
        %359 = vmatprep.subr.mxu0 0.0
        %360 = vmatpush1.msra.mxu0 0.0
        %361 = vmatprep.subr.mxu0 0.0
        %362 = vmatpush1.msra.mxu0 0.0
        %363 = vmatprep.subr.mxu0 0.0
        %364 = vmatpush1.msra.mxu0 0.0
        %365 = vmatprep.subr.mxu0 0.0
        %366 = vmatpush1.msra.mxu0 0.0
        %367 = vmatprep.subr.mxu0 0.0
        %368 = vmatpush1.msra.mxu0 0.0
        %369 = vmatprep.subr.mxu0 %v303
        %370 = vmatpush1.msra.mxu0 %v302
        %371 = vmatprep.subr.mxu0 %v301
        %372 = vmatpush1.msra.mxu0 %v300
        %373 = vmatprep.subr.mxu0 %v299
        %374 = vmatpush1.msra.mxu0 %v298
        %375 = vmatprep.subr.mxu0 %v297
        %376 = vmatpush1.msra.mxu0 %v296
        %377 = vmatprep.subr.mxu0 0.0
        %378 = vmatpush2.msra.mxu0 0.0
        %379 = vmatprep.subr.mxu0 0.0
        %380 = vmatpush2.msra.mxu0 0.0
        %381 = vmatprep.subr.mxu0 0.0
        %382 = vmatpush2.msra.mxu0 0.0
        %383 = vmatprep.subr.mxu0 0.0
        %384 = vmatpush2.msra.mxu0 0.0
        %385 = vmatprep.subr.mxu0 0.0
        %386 = vmatpush2.msra.mxu0 0.0
        %387 = vmatprep.subr.mxu0 0.0
        %388 = vmatpush2.msra.mxu0 0.0
        %389 = vmatprep.subr.mxu0 0.0
        %390 = vmatpush2.msra.mxu0 0.0
        %391 = vmatprep.subr.mxu0 0.0
        %392 = vmatpush2.msra.mxu0 0.0
        %393 = vmatprep.subr.mxu0 0.0
        %394 = vmatpush2.msra.mxu0 0.0
        %395 = vmatprep.subr.mxu0 0.0
        %396 = vmatpush2.msra.mxu0 0.0
        %397 = vmatprep.subr.mxu0 0.0
        %398 = vmatpush2.msra.mxu0 0.0
        %399 = vmatprep.subr.mxu0 0.0
        %400 = vmatpush2.msra.mxu0 0.0
        %401 = vmatprep.subr.mxu0 0.0
        %402 = vmatpush2.msra.mxu0 0.0
        %403 = vmatprep.subr.mxu0 0.0
        %404 = vmatpush2.msra.mxu0 0.0
        %405 = vmatprep.subr.mxu0 0.0
        %406 = vmatpush2.msra.mxu0 0.0
        %407 = vmatprep.subr.mxu0 0.0
        %408 = vmatpush2.msra.mxu0 0.0
        %409 = vmatprep.mubr.f32.mxu0 0.0
        %410 = vmatmul.mubr.f32.gmra.mxu0 %v334
        %v411 = vpop.f32.mrf.mxu0
        %v412 = vadd.f32 %v315, %v411
        %v413 = vpop.f32.mrf.mxu0
        %v414 = vadd.f32 %v315, %v413
        %415 = vmatprep.mubr.f32.mxu0 0.0
        %416 = vmatmul.mubr.f32.gmra.mxu0 %v337
        %v417 = vpop.f32.mrf.mxu0
        %v418 = vadd.f32 %v320, %v417
        %v419 = vpop.f32.mrf.mxu0
        %v420 = vadd.f32 %v320, %v419
        %421 = vmatprep.mubr.f32.mxu0 0.0
        %422 = vmatmul.mubr.f32.gmra.mxu0 %v340
        %v423 = vpop.f32.mrf.mxu0
        %v424 = vadd.f32 %v325, %v423
        %v425 = vpop.f32.mrf.mxu0
        %v426 = vadd.f32 %v325, %v425
        %427 = vmatprep.mubr.f32.mxu0 0.0
        %428 = vmatmul.mubr.f32.gmra.mxu0 %v343
        %v429 = vpop.f32.mrf.mxu0
        %v430 = vadd.f32 %v330, %v429
        %v431 = vpop.f32.mrf.mxu0
        %v432 = vadd.f32 %v330, %v431
        %433 = vdwg.mxu0
        %v434 = vmax.f32 %v412, 0.0
        %v435 = vmax.f32 %v414, 0.0
        %v436 = vmax.f32 %v418, 0.0
        %v437 = vmax.f32 %v420, 0.0
        %v438 = vmax.f32 %v424, 0.0
        %v439 = vmax.f32 %v426, 0.0
        %v440 = vmax.f32 %v430, 0.0
        %v441 = vmax.f32 %v432, 0.0
        %v442 = vld [vmem:[%s3] sm:$0xff]
        %v443 = vld [vmem:[%s3 + $0x8] sm:$0xff]
        %v444 = vld [vmem:[%s3 + $0x10] sm:$0xff]
        %v445 = vld [vmem:[%s3 + $0x18] sm:$0xff]
        %447 = vset.pattern.permute.xlu0 0
        %448 = vperm.xlu0 %447, %v442
        %v449 = vpop.permute.xlu0 %448
        %452 = vset.pattern.permute.xlu0 0
        %453 = vperm.xlu0 %452, %v443
        %v454 = vpop.permute.xlu0 %453
        %457 = vset.pattern.permute.xlu0 0
        %458 = vperm.xlu0 %457, %v444
        %v459 = vpop.permute.xlu0 %458
        %462 = vset.pattern.permute.xlu0 0
        %463 = vperm.xlu0 %462, %v445
        %v464 = vpop.permute.xlu0 %463
        %v466 = vmul.f32 %v449, %v434
        %v467 = vmul.f32 %v449, %v435
        %v468 = vmul.f32 %v454, %v436
        %v469 = vmul.f32 %v454, %v437
        %v470 = vmul.f32 %v459, %v438
        %v471 = vmul.f32 %v459, %v439
        %v472 = vmul.f32 %v464, %v440
        %v473 = vmul.f32 %v464, %v441
        %v474 = vadd.f32 %v466, %v468
        %v475 = vadd.f32 %v474, %v470
        %v476 = vadd.f32 %v475, %v472
        %v477 = vrot.slane %v476, 4
        %v478 = vadd.f32 %v476, %v477
        %v479 = vrot.slane %v478, 2
        %v480 = vadd.f32 %v478, %v479
        %v481 = vrot.slane %v480, 1
        %v482 = vadd.f32 %v480, %v481
        %v483 = vadd.f32 %v467, %v469
        %v484 = vadd.f32 %v483, %v471
        %v485 = vadd.f32 %v484, %v473
        %v486 = vrot.slane %v485, 4
        %v487 = vadd.f32 %v485, %v486
        %v488 = vrot.slane %v487, 2
        %v489 = vadd.f32 %v487, %v488
        %v490 = vrot.slane %v489, 1
        %v491 = vadd.f32 %v489, %v490
        %v492 = vld [vmem:[#allocation2] sm:$0x1]
        %494 = vset.pattern.permute.xlu0 0
        %495 = vperm.xlu0 %494, %v492
        %v496 = vpop.permute.xlu0 %495
        %v498 = vlaneseq
        %v499 = vshrl.u32 %v498, 7
        %v500 = vsub.s32 0, %v499
        %v501 = vrot.slane %v496, %v500
        %v502 = vadd.f32 %v482, %v501
        %v503 = vadd.f32 %v491, %v501
        %v504 = vxor.u32 %v502, 2147483648
        %v505 = vxor.u32 %v503, 2147483648
        %v506 = vmul.f32 %v504, 1.442695
        %v507 = vpow.pop %v506
        %v508 = vmul.f32 %v505, 1.442695
        %v509 = vpow.pop %v508
        %v510 = vadd.f32 %v507, 1.0
        %v511 = vadd.f32 %v509, 1.0
        %v512 = vrcp.pop %v510
        %v513 = vmul.f32 1.0, %v512
        %v514 = vrcp.pop %v511
        %v515 = vmul.f32 1.0, %v514
        %v518 = vcombine.low %v513, %v515
        %v520 = vunpack.c.l.s4 1966171168
        %v521 = vunpack.c.0.s8 %v520
        %v522 = vlaneseq
        %v523 = vshrl.u32 %v522, 7
        %v524 = vsub.s32 %v521, %v523
        %v525 = vrot.slane %v518, %v524
        %v527 = vunpack.c.l.s4 1966171168
        %v528 = vunpack.c.0.s8 %v527
        %v529 = vlaneseq
        %v530 = vshrl.u32 %v529, 7
        %v531 = vsub.s32 %v528, %v530
        %v532 = vrot.slane %v525, %v531
        %v534 = vlaneseq
        %vm535 = vcmp.ge.s32.totalorder %v534, 0
        %vm536 = vcmp.lt.s32.totalorder %v534, 256
        %vm537 = vmand %vm535, %vm536
        %538 = vst.msk [vmem:[%s293] sm:$0x3] %vm537, %v532
        %v539 = vmul.f32 %v296, %v296
        %v540 = vmul.f32 %v297, %v297
        %v541 = vmul.f32 %v298, %v298
        %v542 = vmul.f32 %v299, %v299
        %v543 = vmul.f32 %v300, %v300
        %v544 = vmul.f32 %v301, %v301
        %v545 = vmul.f32 %v302, %v302
        %v546 = vmul.f32 %v303, %v303
        %v547 = vadd.f32 %v539, %v541
        %v548 = vadd.f32 %v547, %v543
        %v549 = vadd.f32 %v548, %v545
        %v550 = vrot.slane %v549, 4
        %v551 = vadd.f32 %v549, %v550
        %v552 = vrot.slane %v551, 2
        %v553 = vadd.f32 %v551, %v552
        %v554 = vrot.slane %v553, 1
        %v555 = vadd.f32 %v553, %v554
        %v556 = vadd.f32 %v540, %v542
        %v557 = vadd.f32 %v556, %v544
        %v558 = vadd.f32 %v557, %v546
        %v559 = vrot.slane %v558, 4
        %v560 = vadd.f32 %v558, %v559
        %v561 = vrot.slane %v560, 2
        %v562 = vadd.f32 %v560, %v561
        %v563 = vrot.slane %v562, 1
        %v564 = vadd.f32 %v562, %v563
        %v565 = vmax.f32 %v555, 1e-24
        %v566 = vmax.f32 %v564, 1e-24
        %v567 = vrsqrt.pop %v565
        %v568 = vrsqrt.pop %v566
        %v569 = vmul.f32 %v296, %v567
        %v570 = vmul.f32 %v297, %v568
        %v571 = vmul.f32 %v298, %v567
        %v572 = vmul.f32 %v299, %v568
        %v573 = vmul.f32 %v300, %v567
        %v574 = vmul.f32 %v301, %v568
        %v575 = vmul.f32 %v302, %v567
        %v576 = vmul.f32 %v303, %v568
        %577 = vst [vmem:[%s288] sm:$0xff] %v569
        %578 = vst [vmem:[%s288 + $0x8] sm:$0xff] %v570
        %579 = vst [vmem:[%s288 + $0x10] sm:$0xff] %v571
        %580 = vst [vmem:[%s288 + $0x18] sm:$0xff] %v572
        %581 = vst [vmem:[%s288 + $0x20] sm:$0xff] %v573
        %582 = vst [vmem:[%s288 + $0x28] sm:$0xff] %v574
        %583 = vst [vmem:[%s288 + $0x30] sm:$0xff] %v575
        %584 = vst [vmem:[%s288 + $0x38] sm:$0xff] %v576
        %s585 = smul.u32 2, %s20
        %p586 = scmp.lt.s32.totalorder %s585, 3
        %s587 = scalar_select %p586, %s585, 3
        %s588 = scalar_lea.vmem %s5, %s587
        %s589 = sand.u32 %s164, 1
        %s590 = sand.u32 %s164, 1
        %s591 = smul.addr %s590, 64
        %s592 = scalar_lea.vmem [#allocation4], %s591
        // Predicated region
        $region64: #{_forward.1} parent=58 // pred_check
          %p593 = pneg %p148
        $region65: #{_forward.1} parent=58 // pred_check_branch
          %595 = sbr.rel (%p593) target = $region67
        $region66: #{_forward.1} parent=58 // pred_region
          %s596 = smul.u32 2, %s20
        $region67: #{_forward.1} parent=58 // pred_fallthru
          _
        // Predicated region
        $region68: #{_forward.1} parent=58 // pred_check
          %p597 = pneg %p174
        $region69: #{_forward.1} parent=58 // pred_check_branch
          %599 = sbr.rel (%p597) target = $region71
        $region70: #{_forward.1} parent=58 // pred_region
          %s600 = smul.u32 2, %s20
          %s601 = smul.addr %s600, 8
          %s602 = scalar_lea.vmem %s6, %s601
          // Predicated region
          $region72: #{_forward.1} parent=70 // pred_check
            _
          $region73: #{_forward.1} parent=70 // pred_check_branch
            %604 = sbr.rel (0) target = $region75
          $region74: #{_forward.1} parent=70 // pred_region
            // Predicated region
            $region76: #{_forward.1} parent=74 // pred_check
              _
            $region77: #{_forward.1} parent=74 // pred_check_branch
              %606 = sbr.rel (0) target = $region79
            $region78: #{_forward.1} parent=74 // pred_region
              loop: start=0, step=1, limit=1
              $region80: #{_forward.1} parent=78 // loop_pre_header
                _
              $region81: #{_forward.1} parent=78 // loop_header
                %s608 = sphi 0, %s612
                %p609 = scmp.ge.s32.totalorder %s608, 1
                %s613 = sphi %s592, %s592
                %s614 = sphi %s602, %s602
              $region82: #{_forward.1} parent=78 // loop_header_branch
                %611 = sbr.rel (%p609) target = $region86
              $region83: #{_forward.1} parent=78 // loop_body
                %v615 = vld [vmem:[%s613] sm:$0xff]
                %616 = vst [vmem:[%s614] sm:$0xff] %v615
                %v617 = vld [vmem:[%s613 + $0x8] sm:$0xff]
                %618 = vst [vmem:[%s614 + $0x8] sm:$0xff] %v617
                %v619 = vld [vmem:[%s613 + $0x10] sm:$0xff]
                %620 = vst [vmem:[%s614 + $0x20] sm:$0xff] %v619
                %v621 = vld [vmem:[%s613 + $0x18] sm:$0xff]
                %622 = vst [vmem:[%s614 + $0x28] sm:$0xff] %v621
                %v623 = vld [vmem:[%s613 + $0x20] sm:$0xff]
                %624 = vst [vmem:[%s614 + $0x40] sm:$0xff] %v623
                %v625 = vld [vmem:[%s613 + $0x28] sm:$0xff]
                %626 = vst [vmem:[%s614 + $0x48] sm:$0xff] %v625
                %v627 = vld [vmem:[%s613 + $0x30] sm:$0xff]
                %628 = vst [vmem:[%s614 + $0x60] sm:$0xff] %v627
                %v629 = vld [vmem:[%s613 + $0x38] sm:$0xff]
                %630 = vst [vmem:[%s614 + $0x68] sm:$0xff] %v629
              $region84: #{_forward.1} parent=78 // loop_footer
                %s612 = sadd.s32 1, %s608
              $region85: #{_forward.1} parent=78 // loop_footer_branch
                %607 = sbr.rel target = $region81
              $region86: #{_forward.1} parent=78 // loop_exit
                _
            $region79: #{_forward.1} parent=74 // pred_fallthru
              _
            // Predicated region
            $region87: #{_forward.1} parent=74 // pred_check
              _
            $region88: #{_forward.1} parent=74 // pred_check_branch
              %632 = sbr.rel target = $region90
            $region89: #{_forward.1} parent=74 // pred_region
              _
            $region90: #{_forward.1} parent=74 // pred_fallthru
              _
          $region75: #{_forward.1} parent=70 // pred_fallthru
            _
          %633 = vnop
        $region71: #{_forward.1} parent=58 // pred_fallthru
          _
      $region59: #{_forward.1} parent=5 // pred_fallthru
        _
      %p634 = scmp.le.s32.totalorder 2, %s15
      // Predicated region
      $region91: #{_forward.1} parent=5 // pred_check
        %p635 = pneg %p634
      $region92: #{_forward.1} parent=5 // pred_check_branch
        %637 = sbr.rel (%p635) target = $region94
      $region93: #{_forward.1} parent=5 // pred_region
        %s638 = ssub.s32 %s15, 2
        // Predicated region
        $region95: #{_forward.1} parent=93 // pred_check
          %p639 = pneg %p154
        $region96: #{_forward.1} parent=93 // pred_check_branch
          %641 = sbr.rel (%p639) target = $region98
        $region97: #{_forward.1} parent=93 // pred_region
          %s642 = smul.u32 2, %s21
          %p643 = scmp.lt.s32.totalorder %s642, 3
          %s644 = scalar_select %p643, %s642, 3
          %s645 = scalar_lea.vmem %s5, %s644
        $region98: #{_forward.1} parent=93 // pred_fallthru
          _
        // Predicated region
        $region99: #{_forward.1} parent=93 // pred_check
          %p646 = pneg %p180
        $region100: #{_forward.1} parent=93 // pred_check_branch
          %648 = sbr.rel (%p646) target = $region102
        $region101: #{_forward.1} parent=93 // pred_region
          %s649 = sand.u32 %s165, 1
          %s650 = sand.u32 %s165, 1
          %s651 = smul.addr %s650, 64
          %s652 = scalar_lea.vmem [#allocation4], %s651
        $region102: #{_forward.1} parent=93 // pred_fallthru
          _
      $region94: #{_forward.1} parent=5 // pred_fallthru
        _
    $region6: #{_forward.1} parent=1 // loop_footer
      %s19 = sadd.s32 1, %s15
    $region7: #{_forward.1} parent=1 // loop_footer_branch
      %14 = sbr.rel target = $region3
    $region8: #{_forward.1} parent=1 // loop_exit
      _

</llo_original>
